<compile_context>
chip_gen: v7x
topology: tpu7x:2x2x1
jax: 0.10.0
libtpu: 0.0.40
codegen_flags: <defaults>
</compile_context>

<pallas_src>
import jax
import jax.numpy as jnp
import numpy as np
from jax.experimental import pallas as pl
from jax.experimental.pallas import tpu as pltpu

LANE = 128
SUBLANE = 8


# --------------------------------------------------------------------------- #
# Kernel
# --------------------------------------------------------------------------- #
def make_actor_kernel(leakiness: float, max_action: float):
    leakiness = float(leakiness)
    max_action = float(max_action)
    # max(h, a*h) == leaky_relu(h, a) only for 0 <= a < 1.
    assert 0.0 <= leakiness < 1.0, "leaky_relu-as-max identity needs 0 <= a < 1"

    def _act(h):
        if leakiness > 0.0:
            return jnp.maximum(h, leakiness * h)
        return jnp.maximum(h, 0.0)

    def actor_kernel(s_ref, w1_ref, b1_ref, w2_ref, b2_ref, w3_ref, b3_ref, o_ref):
        # Weights are bf16; dot LHS cast to bf16 at the MXU boundary only.
        # Accumulation and all elementwise math stay f32.
        x = s_ref[...].astype(jnp.bfloat16)

        # fc1 + leaky_relu          (TB, S) @ (S, H1p)
        h = jnp.dot(x, w1_ref[...], preferred_element_type=jnp.float32) + b1_ref[...]
        h = _act(h)

        # fc2 + leaky_relu          (TB, H1p) @ (H1p, H2p)
        h = jnp.dot(h.astype(jnp.bfloat16), w2_ref[...],
                    preferred_element_type=jnp.float32) + b2_ref[...]
        h = _act(h)

        # fc3 + tanh, scaled        (TB, H2p) @ (H2p, Ap) -> lane-dense store
        h = jnp.dot(h.astype(jnp.bfloat16), w3_ref[...],
                    preferred_element_type=jnp.float32) + b3_ref[...]
        o_ref[...] = (max_action * jnp.tanh(h)).astype(o_ref.dtype)

    return actor_kernel


# --------------------------------------------------------------------------- #
# One-time parameter preparation (hoisted out of the per-call hot path)
# --------------------------------------------------------------------------- #
def _round_up(x: int, m: int) -> int:
    return ((x + m - 1) // m) * m


def _pad2d(x, rows: int, cols: int):
    r, c = x.shape
    if r == rows and c == cols:
        return x
    # Zero-fill is load-bearing: padded W/b columns & rows must stay exactly 0
    # so padded hidden lanes stay 0 through leaky_relu and the padded action
    # lanes come out as tanh(0) = 0 (sliced off in the wrapper).
    return jnp.pad(x, ((0, rows - r), (0, cols - c)))


def prepare_actor_params(params, weight_dtype=jnp.bfloat16):
    """Pad widths to lane multiples and cast weights to bf16.  Call ONCE and
    reuse the result; doing this per forward-call costs more HBM traffic than
    the kernel itself at small batch."""
    S, H1 = params["W1"].shape
    H2 = params["W2"].shape[1]
    A = params["W3"].shape[1]
    H1p, H2p, Ap = _round_up(H1, LANE), _round_up(H2, LANE), _round_up(A, LANE)

    def b2d(b):
        return jnp.asarray(b, jnp.float32).reshape(1, -1)

    prepped = {
        "W1": _pad2d(jnp.asarray(params["W1"], jnp.float32), S, H1p).astype(weight_dtype),
        "b1": _pad2d(b2d(params["b1"]), 1, H1p),
        "W2": _pad2d(jnp.asarray(params["W2"], jnp.float32), H1p, H2p).astype(weight_dtype),
        "b2": _pad2d(b2d(params["b2"]), 1, H2p),
        "W3": _pad2d(jnp.asarray(params["W3"], jnp.float32), H2p, Ap).astype(weight_dtype),
        "b3": _pad2d(b2d(params["b3"]), 1, Ap),
        "state_size": int(S),
        "action_size": int(A),
    }
    return prepped


# --------------------------------------------------------------------------- #
# Batch tiling
# --------------------------------------------------------------------------- #
def _choose_grid(batch: int):
    """Return (tile_rows, n_tiles).

    * >= 2 tiles (even count) whenever batch > 16 so the "parallel" batch axis
      can shard across v7x's 2 TensorCores.
    * tile chosen to minimize padded rows (no 256 -> 512 padding cliff).
    * tiles up to 2048 rows for huge batches to amortize per-step overhead.
    """
    if batch <= 16:
        return _round_up(max(batch, 1), SUBLANE), 1
    max_tb = 512 if batch <= 8192 else 2048
    n = max(2, pl.cdiv(batch, max_tb))
    if n % 2:
        n += 1  # even number of tiles -> balanced 2-TC split
    tb = _round_up(pl.cdiv(batch, n), SUBLANE)
    n = pl.cdiv(batch, tb)
    return tb, n


# --------------------------------------------------------------------------- #
# Forward wrapper
# --------------------------------------------------------------------------- #
def actor_forward(state, prepped, *, leakiness=0.01, max_action=1.0):
    """state: (B, state_size) f32.  prepped: output of prepare_actor_params."""
    state = jnp.asarray(state, jnp.float32)
    B, S = state.shape
    assert S == prepped["state_size"]
    A = prepped["action_size"]

    w1, b1 = prepped["W1"], prepped["b1"]
    w2, b2 = prepped["W2"], prepped["b2"]
    w3, b3 = prepped["W3"], prepped["b3"]
    H1p, H2p, Ap = w1.shape[1], w2.shape[1], w3.shape[1]

    TB, n_tiles = _choose_grid(B)
    B_pad = TB * n_tiles
    if B_pad != B:
        state = jnp.pad(state, ((0, B_pad - B), (0, 0)))

    kernel = make_actor_kernel(float(leakiness), float(max_action))

    # Weights/biases: constant index_map -> fetched once, VMEM-resident.
    const = lambda i: (0, 0)
    in_specs = [
        pl.BlockSpec((TB, S), lambda i: (i, 0)),   # state (pipelined over batch)
        pl.BlockSpec((S, H1p), const),             # W1 (bf16)
        pl.BlockSpec((1, H1p), const),             # b1 (f32)
        pl.BlockSpec((H1p, H2p), const),           # W2 (bf16)
        pl.BlockSpec((1, H2p), const),             # b2 (f32)
        pl.BlockSpec((H2p, Ap), const),            # W3 (bf16)
        pl.BlockSpec((1, Ap), const),              # b3 (f32)
    ]
    out_specs = pl.BlockSpec((TB, Ap), lambda i: (i, 0))

    w_bytes = (w1.size + w2.size + w3.size) * jnp.dtype(w1.dtype).itemsize
    b_bytes = 4 * (b1.size + b2.size + b3.size)
    flops = 2 * B_pad * (S * H1p + H1p * H2p + H2p * Ap)
    cost = pl.CostEstimate(
        flops=flops,
        transcendentals=B_pad * Ap,                       # tanh
        bytes_accessed=4 * B_pad * S + w_bytes + b_bytes + 4 * B_pad * Ap,
    )

    out_padded = pl.pallas_call(
        kernel,
        out_shape=jax.ShapeDtypeStruct((B_pad, Ap), jnp.float32),
        grid=(n_tiles,),
        in_specs=in_specs,
        out_specs=out_specs,
        compiler_params=pltpu.CompilerParams(
            dimension_semantics=("parallel",),   # shard batch tiles over TCs
            vmem_limit_bytes=32 * 1024 * 1024,   # ~13 MiB peak even at TB=2048
        ),
        cost_estimate=cost,
    )(state, w1, b1, w2, b2, w3, b3)

    # Slice off batch padding and the zero-padded action lanes.
    return out_padded[:B, :A]


# --------------------------------------------------------------------------- #
# Parameter init (mimics PyTorch reset_parameters + nn.Linear default bias
# init).  Weights stored as (in, out); biases as (1, out).
# --------------------------------------------------------------------------- #
def init_actor_params(key, state_size, action_size, fc1_units=400, fc2_units=300):
    ks = jax.random.split(key, 6)

    def uniform(k, shape, lim):
        return jax.random.uniform(k, shape, jnp.float32, -lim, lim)

    # PyTorch quirk in hidden_init: uses weight.size()[0] == out_features.
    lim_w1 = 1.0 / np.sqrt(fc1_units)
    lim_w2 = 1.0 / np.sqrt(fc2_units)
    lim_w3 = 0.003
    # nn.Linear default bias init: U(-1/sqrt(in_features), 1/sqrt(in_features)).
    lim_b1 = 1.0 / np.sqrt(state_size)
    lim_b2 = 1.0 / np.sqrt(fc1_units)
    lim_b3 = 1.0 / np.sqrt(fc2_units)

    return {
        "W1": uniform(ks[0], (state_size, fc1_units), lim_w1),
        "b1": uniform(ks[1], (1, fc1_units), lim_b1),
        "W2": uniform(ks[2], (fc1_units, fc2_units), lim_w2),
        "b2": uniform(ks[3], (1, fc2_units), lim_b2),
        "W3": uniform(ks[4], (fc2_units, action_size), lim_w3),
        "b3": uniform(ks[5], (1, action_size), lim_b3),
    }


# --------------------------------------------------------------------------- #
# Reference (float64 on host) for correctness checking
# --------------------------------------------------------------------------- #
def actor_ref(state, params, *, leakiness=0.01, max_action=1.0):
    def lrelu(x):
        return np.where(x > 0, x, leakiness * x) if leakiness > 0 else np.maximum(x, 0.0)

    s = np.asarray(state, np.float64)
    p = {k: np.asarray(v, np.float64) for k, v in params.items()}
    h = lrelu(s @ p["W1"] + p["b1"])
    h = lrelu(h @ p["W2"] + p["b2"])
    return max_action * np.tanh(h @ p["W3"] + p["b3"])


if __name__ == "__main__":
    batch = 8
    state_size = 16
    action_size = 4
    max_action = 2.0
    leakiness = 0.01

    key = jax.random.PRNGKey(0)
    k_param, k_state = jax.random.split(key)

    params = init_actor_params(k_param, state_size, action_size)  # fc1=400, fc2=300
    state = jax.random.normal(k_state, (batch, state_size), jnp.float32)

    # One-time prep (pad + bf16 cast), reused across forward calls.
    prepped = prepare_actor_params(params)

    out = actor_forward(state, prepped, leakiness=leakiness, max_action=max_action)
    out = jax.block_until_ready(out)

    ref = actor_ref(state, params, leakiness=leakiness, max_action=max_action)
    # bf16 weights (f32 accumulation) -> loosened tolerance vs the f64 reference.
    np.testing.assert_allclose(np.asarray(out), ref, rtol=2e-2, atol=5e-3)

    print("KERNEL_OK")
</pallas_src>

<mosaic_0001>
module attributes {stable_mosaic.version = 11 : i64} {
  func.func @actor_kernel(%arg0: i32, %arg1: memref<8x16xf32, #tpu.memory_space<vmem>>, %arg2: memref<16x512xbf16, #tpu.memory_space<vmem>>, %arg3: memref<1x512xf32, #tpu.memory_space<vmem>>, %arg4: memref<512x384xbf16, #tpu.memory_space<vmem>>, %arg5: memref<1x384xf32, #tpu.memory_space<vmem>>, %arg6: memref<384x128xbf16, #tpu.memory_space<vmem>>, %arg7: memref<1x128xf32, #tpu.memory_space<vmem>>, %arg8: memref<8x128xf32, #tpu.memory_space<vmem>>) attributes {dimension_semantics = [#tpu.dimension_semantics<parallel>], iteration_bounds = array<i64: 1>, scalar_prefetch = 0 : i64, scratch_operands = 0 : i64, tpu.core_type = #tpu.core_type<tc>, window_params = [{transform_indices = @transform_0, window_bounds = array<i64: 8, 16>}, {pipeline_mode = #tpu.pipeline_mode<synchronous>, transform_indices = @transform_1, window_bounds = array<i64: 16, 512>}, {pipeline_mode = #tpu.pipeline_mode<synchronous>, transform_indices = @transform_2, window_bounds = array<i64: 1, 512>}, {pipeline_mode = #tpu.pipeline_mode<synchronous>, transform_indices = @transform_3, window_bounds = array<i64: 512, 384>}, {pipeline_mode = #tpu.pipeline_mode<synchronous>, transform_indices = @transform_4, window_bounds = array<i64: 1, 384>}, {pipeline_mode = #tpu.pipeline_mode<synchronous>, transform_indices = @transform_5, window_bounds = array<i64: 384, 128>}, {pipeline_mode = #tpu.pipeline_mode<synchronous>, transform_indices = @transform_6, window_bounds = array<i64: 1, 128>}, {transform_indices = @transform_7, window_bounds = array<i64: 8, 128>}]} {
    %c0 = arith.constant 0 : index
    %c0_0 = arith.constant 0 : index
    %0 = vector.load %arg1[%c0, %c0_0] : memref<8x16xf32, #tpu.memory_space<vmem>>, vector<8x16xf32>
    %1 = arith.truncf %0 : vector<8x16xf32> to vector<8x16xbf16>
    %c0_1 = arith.constant 0 : index
    %c0_2 = arith.constant 0 : index
    %2 = vector.load %arg2[%c0_1, %c0_2] : memref<16x512xbf16, #tpu.memory_space<vmem>>, vector<16x512xbf16>
    %cst = arith.constant dense<0.000000e+00> : vector<8x512xf32>
    %3 = tpu.matmul %1, %2, %cst {dimension_numbers = #tpu.dot_dimension_numbers<[1], [0], [0], [1], [0, 0, 1, 1], [], []>} : vector<8x16xbf16>, vector<16x512xbf16>, vector<8x512xf32> -> vector<8x512xf32>
    %c0_3 = arith.constant 0 : index
    %c0_4 = arith.constant 0 : index
    %4 = vector.load %arg3[%c0_3, %c0_4] : memref<1x512xf32, #tpu.memory_space<vmem>>, vector<1x512xf32>
    %5 = vector.broadcast %4 : vector<1x512xf32> to vector<8x512xf32>
    %6 = arith.addf %3, %5 : vector<8x512xf32>
    %cst_5 = arith.constant 0.00999999977 : f32
    %7 = vector.broadcast %cst_5 : f32 to vector<8x512xf32>
    %8 = arith.mulf %7, %6 : vector<8x512xf32>
    %9 = arith.maximumf %6, %8 : vector<8x512xf32>
    %10 = arith.truncf %9 : vector<8x512xf32> to vector<8x512xbf16>
    %c0_6 = arith.constant 0 : index
    %c0_7 = arith.constant 0 : index
    %11 = vector.load %arg4[%c0_6, %c0_7] : memref<512x384xbf16, #tpu.memory_space<vmem>>, vector<512x384xbf16>
    %cst_8 = arith.constant dense<0.000000e+00> : vector<8x384xf32>
    %12 = tpu.matmul %10, %11, %cst_8 {dimension_numbers = #tpu.dot_dimension_numbers<[1], [0], [0], [1], [0, 0, 1, 1], [], []>} : vector<8x512xbf16>, vector<512x384xbf16>, vector<8x384xf32> -> vector<8x384xf32>
    %c0_9 = arith.constant 0 : index
    %c0_10 = arith.constant 0 : index
    %13 = vector.load %arg5[%c0_9, %c0_10] : memref<1x384xf32, #tpu.memory_space<vmem>>, vector<1x384xf32>
    %14 = vector.broadcast %13 : vector<1x384xf32> to vector<8x384xf32>
    %15 = arith.addf %12, %14 : vector<8x384xf32>
    %cst_11 = arith.constant 0.00999999977 : f32
    %16 = vector.broadcast %cst_11 : f32 to vector<8x384xf32>
    %17 = arith.mulf %16, %15 : vector<8x384xf32>
    %18 = arith.maximumf %15, %17 : vector<8x384xf32>
    %19 = arith.truncf %18 : vector<8x384xf32> to vector<8x384xbf16>
    %c0_12 = arith.constant 0 : index
    %c0_13 = arith.constant 0 : index
    %20 = vector.load %arg6[%c0_12, %c0_13] : memref<384x128xbf16, #tpu.memory_space<vmem>>, vector<384x128xbf16>
    %cst_14 = arith.constant dense<0.000000e+00> : vector<8x128xf32>
    %21 = tpu.matmul %19, %20, %cst_14 {dimension_numbers = #tpu.dot_dimension_numbers<[1], [0], [0], [1], [0, 0, 1, 1], [], []>} : vector<8x384xbf16>, vector<384x128xbf16>, vector<8x128xf32> -> vector<8x128xf32>
    %c0_15 = arith.constant 0 : index
    %c0_16 = arith.constant 0 : index
    %22 = vector.load %arg7[%c0_15, %c0_16] : memref<1x128xf32, #tpu.memory_space<vmem>>, vector<1x128xf32>
    %23 = vector.broadcast %22 : vector<1x128xf32> to vector<8x128xf32>
    %24 = arith.addf %21, %23 : vector<8x128xf32>
    %25 = math.tanh %24 : vector<8x128xf32>
    %cst_17 = arith.constant 2.000000e+00 : f32
    %26 = vector.broadcast %cst_17 : f32 to vector<8x128xf32>
    %27 = arith.mulf %26, %25 : vector<8x128xf32>
    %c0_18 = arith.constant 0 : index
    %c0_19 = arith.constant 0 : index
    %28 = vector.load %arg8[%c0_18, %c0_19] : memref<8x128xf32, #tpu.memory_space<vmem>>, vector<8x128xf32>
    tpu.vector_store %arg8[%c0_18, %c0_19], %27 {strides = array<i32>} : memref<8x128xf32, #tpu.memory_space<vmem>>, vector<8x128xf32>,
    return
  }
  func.func @transform_0(%arg0: i32) -> (i32, i32) {
    %c0_i32 = arith.constant 0 : i32
    %c0_i32_0 = arith.constant 0 : i32
    return %arg0, %c0_i32 : i32, i32
  }
  func.func @transform_1(%arg0: i32) -> (i32, i32) {
    %c0_i32 = arith.constant 0 : i32
    %c0_i32_0 = arith.constant 0 : i32
    %c0_i32_1 = arith.constant 0 : i32
    return %c0_i32, %c0_i32_0 : i32, i32
  }
  func.func @transform_2(%arg0: i32) -> (i32, i32) {
    %c0_i32 = arith.constant 0 : i32
    %c0_i32_0 = arith.constant 0 : i32
    %c0_i32_1 = arith.constant 0 : i32
    return %c0_i32, %c0_i32_0 : i32, i32
  }
  func.func @transform_3(%arg0: i32) -> (i32, i32) {
    %c0_i32 = arith.constant 0 : i32
    %c0_i32_0 = arith.constant 0 : i32
    %c0_i32_1 = arith.constant 0 : i32
    return %c0_i32, %c0_i32_0 : i32, i32
  }
  func.func @transform_4(%arg0: i32) -> (i32, i32) {
    %c0_i32 = arith.constant 0 : i32
    %c0_i32_0 = arith.constant 0 : i32
    %c0_i32_1 = arith.constant 0 : i32
    return %c0_i32, %c0_i32_0 : i32, i32
  }
  func.func @transform_5(%arg0: i32) -> (i32, i32) {
    %c0_i32 = arith.constant 0 : i32
    %c0_i32_0 = arith.constant 0 : i32
    %c0_i32_1 = arith.constant 0 : i32
    return %c0_i32, %c0_i32_0 : i32, i32
  }
  func.func @transform_6(%arg0: i32) -> (i32, i32) {
    %c0_i32 = arith.constant 0 : i32
    %c0_i32_0 = arith.constant 0 : i32
    %c0_i32_1 = arith.constant 0 : i32
    return %c0_i32, %c0_i32_0 : i32, i32
  }
  func.func @transform_7(%arg0: i32) -> (i32, i32) {
    %c0_i32 = arith.constant 0 : i32
    %c0_i32_0 = arith.constant 0 : i32
    return %arg0, %c0_i32 : i32, i32
  }
}

</mosaic_0001>

<llo_original>
// kernel: tpu_custom_call.1
$region0: #{tpu_custom_call.1}
  #allocation0 [shape = 'u32[]', space=smem, size = 0x4, offset = 0x4, fixed_abs, tag = 'smem constant byte address 0x4 - core index']
  #allocation1 [shape = 'u32[144,128]{1,0:T(1,128)}', space=vmem, size = 0x12000, scoped, tag = 'internal scratch']
  %s0 = inlined_call_operand.hbm [shape: f32[8,16], index: 0, kind: input, shape index: {}]
  %s1 = inlined_call_operand.hbm [shape: bf16[16,512], index: 1, kind: input, shape index: {}]
  %s2 = inlined_call_operand.vmem [shape: f32[1,512], index: 2, kind: input, shape index: {}]
  %s3 = inlined_call_operand.hbm [shape: bf16[512,384], index: 3, kind: input, shape index: {}]
  %s4 = inlined_call_operand.vmem [shape: f32[1,384], index: 4, kind: input, shape index: {}]
  %s5 = inlined_call_operand.hbm [shape: bf16[384,128], index: 5, kind: input, shape index: {}]
  %s6 = inlined_call_operand.vmem [shape: f32[1,128], index: 6, kind: input, shape index: {}]
  %s7 = inlined_call_operand.hbm [shape: f32[8,128], index: 7, kind: output, shape index: {}]
  %s8 = sld [smem:[#allocation0]]
  $region54: #{tpu_custom_call.1} parent=0
    _
  %s10 = ssub.s32 1, %s8
  %s11 = scalar_select 0, %s10, %s8
  $region1: #{tpu_custom_call.1} parent=0
    #allocation2 [shape = 'u8[4096]{0}', space=vmem, size = 0x1000, scoped, tag = 'input window, operand 0, single buffered']
    #allocation3 [shape = 's32[1]{0}', space=sflag, size = 0x4, scoped, tag = 'scoped memory for tpu_custom_call.1']
    #allocation4 [shape = 's32[1]{0}', space=sflag, size = 0x4, scoped, tag = 'scoped memory for tpu_custom_call.1']
    #allocation5 [shape = 'u8[16384]{0}', space=vmem, size = 0x4000, scoped, tag = 'input window, operand 1, single buffered']
    #allocation6 [shape = 's32[1]{0}', space=sflag, size = 0x4, scoped, tag = 'scoped memory for tpu_custom_call.1']
    #allocation7 [shape = 'u8[393216]{0}', space=vmem, size = 0x60000, scoped, tag = 'input window, operand 3, single buffered']
    #allocation8 [shape = 'u8[98304]{0}', space=vmem, size = 0x18000, scoped, tag = 'input window, operand 5, single buffered']
    #allocation9 [shape = 's32[1]{0}', space=sflag, size = 0x4, scoped, tag = 'scoped memory for tpu_custom_call.1']
    #allocation10 [shape = 'u8[4096]{0}', space=vmem, size = 0x1000, scoped, tag = 'output window, operand 0, single buffered']
    %12 = vsyncpa [#allocation3], 0
    %13 = vsyncpa [#allocation6], 0
    %14 = vsyncpa [#allocation9], 0
    %15 = vsyncpa [#allocation4], 0
    // Predicated region
    $region2: #{tpu_custom_call.1} parent=1 // pred_check
      _
    $region3: #{tpu_custom_call.1} parent=1 // pred_check_branch
      %17 = sbr.rel (0) target = $region5
    $region4: #{tpu_custom_call.1} parent=1 // pred_region
      %s19 = ssub.s32 128, 128
      %20 = vsyncadd [#allocation3], %s19
      %s22 = sshll.u32 [#allocation2], 4
      %s23 = int_to_ptr.vmem [resolvable:$true] %s22
      %25 = dma.hbm_to_vmem [thread:$0]  %s0, 128, %s23, [#allocation3]
    $region5: #{tpu_custom_call.1} parent=1 // pred_fallthru
      _
    // Predicated region
    $region6: #{tpu_custom_call.1} parent=1 // pred_check
      _
    $region7: #{tpu_custom_call.1} parent=1 // pred_check_branch
      %27 = sbr.rel (0) target = $region9
    $region8: #{tpu_custom_call.1} parent=1 // pred_region
      %s29 = ssub.s32 512, 512
      %30 = vsyncadd [#allocation6], %s29
      %s31 = sshll.u32 [#allocation5], 4
      %s32 = int_to_ptr.vmem [resolvable:$true] %s31
      %37 = dma.hbm_to_vmem [thread:$0]  %s1, 512, %s32, [#allocation6], 256, 256, 16
    $region9: #{tpu_custom_call.1} parent=1 // pred_fallthru
      _
    // Predicated region
    $region10: #{tpu_custom_call.1} parent=1 // pred_check
      _
    $region11: #{tpu_custom_call.1} parent=1 // pred_check_branch
      %39 = sbr.rel (0) target = $region13
    $region12: #{tpu_custom_call.1} parent=1 // pred_region
      _
    $region13: #{tpu_custom_call.1} parent=1 // pred_fallthru
      _
    // Predicated region
    $region14: #{tpu_custom_call.1} parent=1 // pred_check
      _
    $region15: #{tpu_custom_call.1} parent=1 // pred_check_branch
      %41 = sbr.rel (0) target = $region17
    $region16: #{tpu_custom_call.1} parent=1 // pred_region
      %s43 = ssub.s32 12288, 12288
      %44 = vsyncadd [#allocation6], %s43
      %s45 = sshll.u32 [#allocation7], 4
      %s46 = int_to_ptr.vmem [resolvable:$true] %s45
      %51 = dma.hbm_to_vmem [thread:$0]  %s3, 12288, %s46, [#allocation6], 192, 192, 12
    $region17: #{tpu_custom_call.1} parent=1 // pred_fallthru
      _
    // Predicated region
    $region18: #{tpu_custom_call.1} parent=1 // pred_check
      _
    $region19: #{tpu_custom_call.1} parent=1 // pred_check_branch
      %53 = sbr.rel (0) target = $region21
    $region20: #{tpu_custom_call.1} parent=1 // pred_region
      _
    $region21: #{tpu_custom_call.1} parent=1 // pred_fallthru
      _
    // Predicated region
    $region22: #{tpu_custom_call.1} parent=1 // pred_check
      _
    $region23: #{tpu_custom_call.1} parent=1 // pred_check_branch
      %55 = sbr.rel (0) target = $region25
    $region24: #{tpu_custom_call.1} parent=1 // pred_region
      %s57 = ssub.s32 3072, 3072
      %58 = vsyncadd [#allocation9], %s57
      %s59 = sshll.u32 [#allocation8], 4
      %s60 = int_to_ptr.vmem [resolvable:$true] %s59
      %65 = dma.hbm_to_vmem [thread:$0]  %s5, 3072, %s60, [#allocation9], 64, 64, 4
    $region25: #{tpu_custom_call.1} parent=1 // pred_fallthru
      _
    // Predicated region
    $region26: #{tpu_custom_call.1} parent=1 // pred_check
      _
    $region27: #{tpu_custom_call.1} parent=1 // pred_check_branch
      %67 = sbr.rel (0) target = $region29
    $region28: #{tpu_custom_call.1} parent=1 // pred_region
      _
    $region29: #{tpu_custom_call.1} parent=1 // pred_fallthru
      _
    // Predicated region
    $region30: #{tpu_custom_call.1} parent=1 // pred_check
      _
    $region31: #{tpu_custom_call.1} parent=1 // pred_check_branch
      %69 = sbr.rel (0) target = $region33
    $region32: #{tpu_custom_call.1} parent=1 // pred_region
      %70 = dma.done [#allocation3], 128
    $region33: #{tpu_custom_call.1} parent=1 // pred_fallthru
      _
    // Predicated region
    $region34: #{tpu_custom_call.1} parent=1 // pred_check
      _
    $region35: #{tpu_custom_call.1} parent=1 // pred_check_branch
      %72 = sbr.rel (0) target = $region37
    $region36: #{tpu_custom_call.1} parent=1 // pred_region
      %73 = dma.done [#allocation6], 512
    $region37: #{tpu_custom_call.1} parent=1 // pred_fallthru
      _
    // Predicated region
    $region38: #{tpu_custom_call.1} parent=1 // pred_check
      _
    $region39: #{tpu_custom_call.1} parent=1 // pred_check_branch
      %75 = sbr.rel (0) target = $region41
    $region40: #{tpu_custom_call.1} parent=1 // pred_region
      %76 = dma.done [#allocation6], 12288
    $region41: #{tpu_custom_call.1} parent=1 // pred_fallthru
      _
    // Predicated region
    $region42: #{tpu_custom_call.1} parent=1 // pred_check
      _
    $region43: #{tpu_custom_call.1} parent=1 // pred_check_branch
      %78 = sbr.rel (0) target = $region45
    $region44: #{tpu_custom_call.1} parent=1 // pred_region
      %79 = dma.done [#allocation9], 3072
    $region45: #{tpu_custom_call.1} parent=1 // pred_fallthru
      _
    %v81 = vld [vmem:[#allocation2] sm:$0xff]
    %v82 = vpack.c.bf16 %v81, %v81
    %v83 = vld [vmem:[#allocation5] sm:$0xff]
    %v84 = vld [vmem:[#allocation5 + $0x8] sm:$0xff]
    %v85 = vld [vmem:[#allocation5 + $0x10] sm:$0xff]
    %v86 = vld [vmem:[#allocation5 + $0x18] sm:$0xff]
    %v87 = vld [vmem:[%s2] sm:$0xf]
    %v89 = vlaneseq
    %v90 = vshrl.u32 %v89, 7
    %v91 = vsub.s32 0, %v90
    %v92 = vrot.slane %v87, %v91
    %v93 = vlaneseq
    %v94 = vshrl.u32 %v93, 7
    %v95 = vsub.s32 1, %v94
    %v96 = vrot.slane %v87, %v95
    %v97 = vlaneseq
    %v98 = vshrl.u32 %v97, 7
    %v99 = vsub.s32 2, %v98
    %v100 = vrot.slane %v87, %v99
    %v101 = vlaneseq
    %v102 = vshrl.u32 %v101, 7
    %v103 = vsub.s32 3, %v102
    %v104 = vrot.slane %v87, %v103
    %v113 = vunpack.c.l.b16 %v83
    %v114 = vunpack.c.h.b16 %v83
    %v115 = vunpack.c.l.b16 %v84
    %v116 = vunpack.c.h.b16 %v84
    %v117 = vunpack.c.l.b16 %v85
    %v118 = vunpack.c.h.b16 %v85
    %v119 = vunpack.c.l.b16 %v86
    %v120 = vunpack.c.h.b16 %v86
    %v121 = vpack.c.b16 %v117, %v113
    %v122 = vpack.c.b16 %v118, %v114
    %v123 = vpack.c.b16 %v119, %v115
    %v124 = vpack.c.b16 %v120, %v116
    %vm129 = vcmask 130048
    %v131 = vsel %vm129, %v82, 0
    %133 = vmatprep.subr.bf16.mxu0 %v122
    %134 = vmatpush1.bf16.msra.mxu0 %v121
    %135 = vmatprep.subr.bf16.mxu0 0
    %136 = vmatpush1.bf16.msra.mxu0 0
    %137 = vmatprep.subr.bf16.mxu0 0
    %138 = vmatpush1.bf16.msra.mxu0 0
    %139 = vmatprep.subr.bf16.mxu0 0
    %140 = vmatpush1.bf16.msra.mxu0 0
    %141 = vmatprep.subr.bf16.mxu0 0
    %142 = vmatpush1.bf16.msra.mxu0 0
    %143 = vmatprep.subr.bf16.mxu0 0
    %144 = vmatpush1.bf16.msra.mxu0 0
    %145 = vmatprep.subr.bf16.mxu0 0
    %146 = vmatpush1.bf16.msra.mxu0 0
    %147 = vmatprep.subr.bf16.mxu0 0
    %148 = vmatpush1.bf16.msra.mxu0 0
    %149 = vmatprep.subr.bf16.mxu0 0
    %150 = vmatpush1.bf16.msra.mxu0 0
    %151 = vmatprep.subr.bf16.mxu0 0
    %152 = vmatpush1.bf16.msra.mxu0 0
    %153 = vmatprep.subr.bf16.mxu0 0
    %154 = vmatpush1.bf16.msra.mxu0 0
    %155 = vmatprep.subr.bf16.mxu0 0
    %156 = vmatpush1.bf16.msra.mxu0 0
    %157 = vmatprep.subr.bf16.mxu0 0
    %158 = vmatpush1.bf16.msra.mxu0 0
    %159 = vmatprep.subr.bf16.mxu0 0
    %160 = vmatpush1.bf16.msra.mxu0 0
    %161 = vmatprep.subr.bf16.mxu0 0
    %162 = vmatpush1.bf16.msra.mxu0 0
    %163 = vmatprep.subr.bf16.mxu0 0
    %164 = vmatpush1.bf16.msra.mxu0 0
    %165 = vmatprep.mubr.bf16.mxu0 0
    %166 = vmatmul.mubr.bf16.gmra.mrb[0].mxu0 %v131
    %v167 = vpop.f32.mrb[0].mxu0
    %v168 = vadd.f32 %v92, %v167
    %v169 = vpop.f32.mrb[0].mxu0
    %v170 = vadd.f32 %v96, %v169
    %v171 = vpop.f32.mrb[0].mxu0
    %v172 = vpop.f32.mrb[0].mxu0
    %173 = vdwg.mxu0
    %174 = vmatprep.subr.bf16.mxu0 %v124
    %175 = vmatpush1.bf16.msra.mxu0 %v123
    %176 = vmatprep.subr.bf16.mxu0 0
    %177 = vmatpush1.bf16.msra.mxu0 0
    %178 = vmatprep.subr.bf16.mxu0 0
    %179 = vmatpush1.bf16.msra.mxu0 0
    %180 = vmatprep.subr.bf16.mxu0 0
    %181 = vmatpush1.bf16.msra.mxu0 0
    %182 = vmatprep.subr.bf16.mxu0 0
    %183 = vmatpush1.bf16.msra.mxu0 0
    %184 = vmatprep.subr.bf16.mxu0 0
    %185 = vmatpush1.bf16.msra.mxu0 0
    %186 = vmatprep.subr.bf16.mxu0 0
    %187 = vmatpush1.bf16.msra.mxu0 0
    %188 = vmatprep.subr.bf16.mxu0 0
    %189 = vmatpush1.bf16.msra.mxu0 0
    %190 = vmatprep.subr.bf16.mxu0 0
    %191 = vmatpush1.bf16.msra.mxu0 0
    %192 = vmatprep.subr.bf16.mxu0 0
    %193 = vmatpush1.bf16.msra.mxu0 0
    %194 = vmatprep.subr.bf16.mxu0 0
    %195 = vmatpush1.bf16.msra.mxu0 0
    %196 = vmatprep.subr.bf16.mxu0 0
    %197 = vmatpush1.bf16.msra.mxu0 0
    %198 = vmatprep.subr.bf16.mxu0 0
    %199 = vmatpush1.bf16.msra.mxu0 0
    %200 = vmatprep.subr.bf16.mxu0 0
    %201 = vmatpush1.bf16.msra.mxu0 0
    %202 = vmatprep.subr.bf16.mxu0 0
    %203 = vmatpush1.bf16.msra.mxu0 0
    %204 = vmatprep.subr.bf16.mxu0 0
    %205 = vmatpush1.bf16.msra.mxu0 0
    %206 = vmatprep.mubr.bf16.mxu0 0
    %207 = vmatmul.mubr.bf16.gmra.mrb[0].mxu0 %v131
    %v208 = vpop.f32.mrb[0].mxu0
    %v209 = vadd.f32 %v100, %v208
    %v210 = vpop.f32.mrb[0].mxu0
    %v211 = vadd.f32 %v104, %v210
    %v212 = vpop.f32.mrb[0].mxu0
    %v213 = vpop.f32.mrb[0].mxu0
    %214 = vdwg.mxu0
    %v215 = vmul.f32 %v168, 0.01
    %v216 = vmul.f32 %v170, 0.01
    %v217 = vmul.f32 %v209, 0.01
    %v218 = vmul.f32 %v211, 0.01
    %v219 = vmax.f32 %v168, %v215
    %v220 = vmax.f32 %v170, %v216
    %v221 = vmax.f32 %v209, %v217
    %v222 = vmax.f32 %v211, %v218
    %v223 = vpack.c.bf16 %v219, %v219
    %v224 = vpack.c.bf16 %v220, %v220
    %v225 = vpack.c.bf16 %v221, %v221
    %v226 = vpack.c.bf16 %v222, %v222
    %v227 = vld [vmem:[#allocation7] sm:$0xff]
    %v228 = vld [vmem:[#allocation7 + $0x8] sm:$0xf]
    %v229 = vld [vmem:[#allocation7 + $0xc] sm:$0xff]
    %v230 = vld [vmem:[#allocation7 + $0x14] sm:$0xf]
    %v231 = vld [vmem:[#allocation7 + $0x18] sm:$0xff]
    %v232 = vld [vmem:[#allocation7 + $0x20] sm:$0xf]
    %v233 = vld [vmem:[#allocation7 + $0x24] sm:$0xff]
    %v234 = vld [vmem:[#allocation7 + $0x2c] sm:$0xf]
    %v235 = vld [vmem:[#allocation7 + $0x30] sm:$0xff]
    %v236 = vld [vmem:[#allocation7 + $0x38] sm:$0xf]
    %v237 = vld [vmem:[#allocation7 + $0x3c] sm:$0xff]
    %v238 = vld [vmem:[#allocation7 + $0x44] sm:$0xf]
    %v239 = vld [vmem:[#allocation7 + $0x48] sm:$0xff]
    %v240 = vld [vmem:[#allocation7 + $0x50] sm:$0xf]
    %v241 = vld [vmem:[#allocation7 + $0x54] sm:$0xff]
    %v242 = vld [vmem:[#allocation7 + $0x5c] sm:$0xf]
    %v243 = vld [vmem:[#allocation7 + $0x60] sm:$0xff]
    %v244 = vld [vmem:[#allocation7 + $0x68] sm:$0xf]
    %v245 = vld [vmem:[#allocation7 + $0x6c] sm:$0xff]
    %v246 = vld [vmem:[#allocation7 + $0x74] sm:$0xf]
    %v247 = vld [vmem:[#allocation7 + $0x78] sm:$0xff]
    %v248 = vld [vmem:[#allocation7 + $0x80] sm:$0xf]
    %v249 = vld [vmem:[#allocation7 + $0x84] sm:$0xff]
    %v250 = vld [vmem:[#allocation7 + $0x8c] sm:$0xf]
    %v251 = vld [vmem:[#allocation7 + $0x90] sm:$0xff]
    %v252 = vld [vmem:[#allocation7 + $0x98] sm:$0xf]
    %v253 = vld [vmem:[#allocation7 + $0x9c] sm:$0xff]
    %v254 = vld [vmem:[#allocation7 + $0xa4] sm:$0xf]
    %v255 = vld [vmem:[#allocation7 + $0xa8] sm:$0xff]
    %v256 = vld [vmem:[#allocation7 + $0xb0] sm:$0xf]
    %v257 = vld [vmem:[#allocation7 + $0xb4] sm:$0xff]
    %v258 = vld [vmem:[#allocation7 + $0xbc] sm:$0xf]
    %v259 = vld [vmem:[#allocation7 + $0xc0] sm:$0xff]
    %v260 = vld [vmem:[#allocation7 + $0xc8] sm:$0xf]
    %v261 = vld [vmem:[#allocation7 + $0xcc] sm:$0xff]
    %v262 = vld [vmem:[#allocation7 + $0xd4] sm:$0xf]
    %v263 = vld [vmem:[#allocation7 + $0xd8] sm:$0xff]
    %v264 = vld [vmem:[#allocation7 + $0xe0] sm:$0xf]
    %v265 = vld [vmem:[#allocation7 + $0xe4] sm:$0xff]
    %v266 = vld [vmem:[#allocation7 + $0xec] sm:$0xf]
    %v267 = vld [vmem:[#allocation7 + $0xf0] sm:$0xff]
    %v268 = vld [vmem:[#allocation7 + $0xf8] sm:$0xf]
    %v269 = vld [vmem:[#allocation7 + $0xfc] sm:$0xff]
    %v270 = vld [vmem:[#allocation7 + $0x104] sm:$0xf]
    %v271 = vld [vmem:[#allocation7 + $0x108] sm:$0xff]
    %v272 = vld [vmem:[#allocation7 + $0x110] sm:$0xf]
    %v273 = vld [vmem:[#allocation7 + $0x114] sm:$0xff]
    %v274 = vld [vmem:[#allocation7 + $0x11c] sm:$0xf]
    %v275 = vld [vmem:[#allocation7 + $0x120] sm:$0xff]
    %v276 = vld [vmem:[#allocation7 + $0x128] sm:$0xf]
    %v277 = vld [vmem:[#allocation7 + $0x12c] sm:$0xff]
    %v278 = vld [vmem:[#allocation7 + $0x134] sm:$0xf]
    %v279 = vld [vmem:[#allocation7 + $0x138] sm:$0xff]
    %v280 = vld [vmem:[#allocation7 + $0x140] sm:$0xf]
    %v281 = vld [vmem:[#allocation7 + $0x144] sm:$0xff]
    %v282 = vld [vmem:[#allocation7 + $0x14c] sm:$0xf]
    %v283 = vld [vmem:[#allocation7 + $0x150] sm:$0xff]
    %v284 = vld [vmem:[#allocation7 + $0x158] sm:$0xf]
    %v285 = vld [vmem:[#allocation7 + $0x15c] sm:$0xff]
    %v286 = vld [vmem:[#allocation7 + $0x164] sm:$0xf]
    %v287 = vld [vmem:[#allocation7 + $0x168] sm:$0xff]
    %v288 = vld [vmem:[#allocation7 + $0x170] sm:$0xf]
    %v289 = vld [vmem:[#allocation7 + $0x174] sm:$0xff]
    %v290 = vld [vmem:[#allocation7 + $0x17c] sm:$0xf]
    %v291 = vld [vmem:[#allocation7 + $0x180] sm:$0xff]
    %v292 = vld [vmem:[#allocation7 + $0x188] sm:$0xf]
    %v293 = vld [vmem:[#allocation7 + $0x18c] sm:$0xff]
    %v294 = vld [vmem:[#allocation7 + $0x194] sm:$0xf]
    %v295 = vld [vmem:[#allocation7 + $0x198] sm:$0xff]
    %v296 = vld [vmem:[#allocation7 + $0x1a0] sm:$0xf]
    %v297 = vld [vmem:[#allocation7 + $0x1a4] sm:$0xff]
    %v298 = vld [vmem:[#allocation7 + $0x1ac] sm:$0xf]
    %v299 = vld [vmem:[#allocation7 + $0x1b0] sm:$0xff]
    %v300 = vld [vmem:[#allocation7 + $0x1b8] sm:$0xf]
    %v301 = vld [vmem:[#allocation7 + $0x1bc] sm:$0xff]
    %v302 = vld [vmem:[#allocation7 + $0x1c4] sm:$0xf]
    %v303 = vld [vmem:[#allocation7 + $0x1c8] sm:$0xff]
    %v304 = vld [vmem:[#allocation7 + $0x1d0] sm:$0xf]
    %v305 = vld [vmem:[#allocation7 + $0x1d4] sm:$0xff]
    %v306 = vld [vmem:[#allocation7 + $0x1dc] sm:$0xf]
    %v307 = vld [vmem:[#allocation7 + $0x1e0] sm:$0xff]
    %v308 = vld [vmem:[#allocation7 + $0x1e8] sm:$0xf]
    %v309 = vld [vmem:[#allocation7 + $0x1ec] sm:$0xff]
    %v310 = vld [vmem:[#allocation7 + $0x1f4] sm:$0xf]
    %v311 = vld [vmem:[#allocation7 + $0x1f8] sm:$0xff]
    %v312 = vld [vmem:[#allocation7 + $0x200] sm:$0xf]
    %v313 = vld [vmem:[#allocation7 + $0x204] sm:$0xff]
    %v314 = vld [vmem:[#allocation7 + $0x20c] sm:$0xf]
    %v315 = vld [vmem:[#allocation7 + $0x210] sm:$0xff]
    %v316 = vld [vmem:[#allocation7 + $0x218] sm:$0xf]
    %v317 = vld [vmem:[#allocation7 + $0x21c] sm:$0xff]
    %v318 = vld [vmem:[#allocation7 + $0x224] sm:$0xf]
    %v319 = vld [vmem:[#allocation7 + $0x228] sm:$0xff]
    %v320 = vld [vmem:[#allocation7 + $0x230] sm:$0xf]
    %v321 = vld [vmem:[#allocation7 + $0x234] sm:$0xff]
    %v322 = vld [vmem:[#allocation7 + $0x23c] sm:$0xf]
    %v323 = vld [vmem:[#allocation7 + $0x240] sm:$0xff]
    %v324 = vld [vmem:[#allocation7 + $0x248] sm:$0xf]
    %v325 = vld [vmem:[#allocation7 + $0x24c] sm:$0xff]
    %v326 = vld [vmem:[#allocation7 + $0x254] sm:$0xf]
    %v327 = vld [vmem:[#allocation7 + $0x258] sm:$0xff]
    %v328 = vld [vmem:[#allocation7 + $0x260] sm:$0xf]
    %v329 = vld [vmem:[#allocation7 + $0x264] sm:$0xff]
    %v330 = vld [vmem:[#allocation7 + $0x26c] sm:$0xf]
    %v331 = vld [vmem:[#allocation7 + $0x270] sm:$0xff]
    %v332 = vld [vmem:[#allocation7 + $0x278] sm:$0xf]
    %v333 = vld [vmem:[#allocation7 + $0x27c] sm:$0xff]
    %v334 = vld [vmem:[#allocation7 + $0x284] sm:$0xf]
    %v335 = vld [vmem:[#allocation7 + $0x288] sm:$0xff]
    %v336 = vld [vmem:[#allocation7 + $0x290] sm:$0xf]
    %v337 = vld [vmem:[#allocation7 + $0x294] sm:$0xff]
    %v338 = vld [vmem:[#allocation7 + $0x29c] sm:$0xf]
    %v339 = vld [vmem:[#allocation7 + $0x2a0] sm:$0xff]
    %v340 = vld [vmem:[#allocation7 + $0x2a8] sm:$0xf]
    %v341 = vld [vmem:[#allocation7 + $0x2ac] sm:$0xff]
    %v342 = vld [vmem:[#allocation7 + $0x2b4] sm:$0xf]
    %v343 = vld [vmem:[#allocation7 + $0x2b8] sm:$0xff]
    %v344 = vld [vmem:[#allocation7 + $0x2c0] sm:$0xf]
    %v345 = vld [vmem:[#allocation7 + $0x2c4] sm:$0xff]
    %v346 = vld [vmem:[#allocation7 + $0x2cc] sm:$0xf]
    %v347 = vld [vmem:[#allocation7 + $0x2d0] sm:$0xff]
    %v348 = vld [vmem:[#allocation7 + $0x2d8] sm:$0xf]
    %v349 = vld [vmem:[#allocation7 + $0x2dc] sm:$0xff]
    %v350 = vld [vmem:[#allocation7 + $0x2e4] sm:$0xf]
    %v351 = vld [vmem:[#allocation7 + $0x2e8] sm:$0xff]
    %v352 = vld [vmem:[#allocation7 + $0x2f0] sm:$0xf]
    %v353 = vld [vmem:[#allocation7 + $0x2f4] sm:$0xff]
    %v354 = vld [vmem:[#allocation7 + $0x2fc] sm:$0xf]
    %v355 = vld [vmem:[%s4] sm:$0x7]
    %v357 = vlaneseq
    %v358 = vshrl.u32 %v357, 7
    %v359 = vsub.s32 0, %v358
    %v360 = vrot.slane %v355, %v359
    %v361 = vlaneseq
    %v362 = vshrl.u32 %v361, 7
    %v363 = vsub.s32 1, %v362
    %v364 = vrot.slane %v355, %v363
    %v365 = vlaneseq
    %v366 = vshrl.u32 %v365, 7
    %v367 = vsub.s32 2, %v366
    %v368 = vrot.slane %v355, %v367
    %v500 = vunpack.c.l.b16 %v227
    %v501 = vunpack.c.h.b16 %v227
    %v502 = vunpack.c.l.b16 %v228
    %v503 = vunpack.c.l.b16 %v229
    %v504 = vunpack.c.h.b16 %v229
    %v505 = vunpack.c.l.b16 %v230
    %v506 = vunpack.c.l.b16 %v231
    %v507 = vunpack.c.h.b16 %v231
    %v508 = vunpack.c.l.b16 %v232
    %v509 = vunpack.c.l.b16 %v233
    %v510 = vunpack.c.h.b16 %v233
    %v511 = vunpack.c.l.b16 %v234
    %v512 = vunpack.c.l.b16 %v235
    %v513 = vunpack.c.h.b16 %v235
    %v514 = vunpack.c.l.b16 %v236
    %v515 = vunpack.c.l.b16 %v237
    %v516 = vunpack.c.h.b16 %v237
    %v517 = vunpack.c.l.b16 %v238
    %v518 = vunpack.c.l.b16 %v239
    %v519 = vunpack.c.h.b16 %v239
    %v520 = vunpack.c.l.b16 %v240
    %v521 = vunpack.c.l.b16 %v241
    %v522 = vunpack.c.h.b16 %v241
    %v523 = vunpack.c.l.b16 %v242
    %v524 = vunpack.c.l.b16 %v243
    %v525 = vunpack.c.h.b16 %v243
    %v526 = vunpack.c.l.b16 %v244
    %v527 = vunpack.c.l.b16 %v245
    %v528 = vunpack.c.h.b16 %v245
    %v529 = vunpack.c.l.b16 %v246
    %v530 = vunpack.c.l.b16 %v247
    %v531 = vunpack.c.h.b16 %v247
    %v532 = vunpack.c.l.b16 %v248
    %v533 = vunpack.c.l.b16 %v249
    %v534 = vunpack.c.h.b16 %v249
    %v535 = vunpack.c.l.b16 %v250
    %v536 = vunpack.c.l.b16 %v251
    %v537 = vunpack.c.h.b16 %v251
    %v538 = vunpack.c.l.b16 %v252
    %v539 = vunpack.c.l.b16 %v253
    %v540 = vunpack.c.h.b16 %v253
    %v541 = vunpack.c.l.b16 %v254
    %v542 = vunpack.c.l.b16 %v255
    %v543 = vunpack.c.h.b16 %v255
    %v544 = vunpack.c.l.b16 %v256
    %v545 = vunpack.c.l.b16 %v257
    %v546 = vunpack.c.h.b16 %v257
    %v547 = vunpack.c.l.b16 %v258
    %v548 = vunpack.c.l.b16 %v259
    %v549 = vunpack.c.h.b16 %v259
    %v550 = vunpack.c.l.b16 %v260
    %v551 = vunpack.c.l.b16 %v261
    %v552 = vunpack.c.h.b16 %v261
    %v553 = vunpack.c.l.b16 %v262
    %v554 = vunpack.c.l.b16 %v263
    %v555 = vunpack.c.h.b16 %v263
    %v556 = vunpack.c.l.b16 %v264
    %v557 = vunpack.c.l.b16 %v265
    %v558 = vunpack.c.h.b16 %v265
    %v559 = vunpack.c.l.b16 %v266
    %v560 = vunpack.c.l.b16 %v267
    %v561 = vunpack.c.h.b16 %v267
    %v562 = vunpack.c.l.b16 %v268
    %v563 = vunpack.c.l.b16 %v269
    %v564 = vunpack.c.h.b16 %v269
    %v565 = vunpack.c.l.b16 %v270
    %v566 = vunpack.c.l.b16 %v271
    %v567 = vunpack.c.h.b16 %v271
    %v568 = vunpack.c.l.b16 %v272
    %v569 = vunpack.c.l.b16 %v273
    %v570 = vunpack.c.h.b16 %v273
    %v571 = vunpack.c.l.b16 %v274
    %v572 = vunpack.c.l.b16 %v275
    %v573 = vunpack.c.h.b16 %v275
    %v574 = vunpack.c.l.b16 %v276
    %v575 = vunpack.c.l.b16 %v277
    %v576 = vunpack.c.h.b16 %v277
    %v577 = vunpack.c.l.b16 %v278
    %v578 = vunpack.c.l.b16 %v279
    %v579 = vunpack.c.h.b16 %v279
    %v580 = vunpack.c.l.b16 %v280
    %v581 = vunpack.c.l.b16 %v281
    %v582 = vunpack.c.h.b16 %v281
    %v583 = vunpack.c.l.b16 %v282
    %v584 = vunpack.c.l.b16 %v283
    %v585 = vunpack.c.h.b16 %v283
    %v586 = vunpack.c.l.b16 %v284
    %v587 = vunpack.c.l.b16 %v285
    %v588 = vunpack.c.h.b16 %v285
    %v589 = vunpack.c.l.b16 %v286
    %v590 = vunpack.c.l.b16 %v287
    %v591 = vunpack.c.h.b16 %v287
    %v592 = vunpack.c.l.b16 %v288
    %v593 = vunpack.c.l.b16 %v289
    %v594 = vunpack.c.h.b16 %v289
    %v595 = vunpack.c.l.b16 %v290
    %v596 = vunpack.c.l.b16 %v291
    %v597 = vunpack.c.h.b16 %v291
    %v598 = vunpack.c.l.b16 %v292
    %v599 = vunpack.c.l.b16 %v293
    %v600 = vunpack.c.h.b16 %v293
    %v601 = vunpack.c.l.b16 %v294
    %v602 = vunpack.c.l.b16 %v295
    %v603 = vunpack.c.h.b16 %v295
    %v604 = vunpack.c.l.b16 %v296
    %v605 = vunpack.c.l.b16 %v297
    %v606 = vunpack.c.h.b16 %v297
    %v607 = vunpack.c.l.b16 %v298
    %v608 = vunpack.c.l.b16 %v299
    %v609 = vunpack.c.h.b16 %v299
    %v610 = vunpack.c.l.b16 %v300
    %v611 = vunpack.c.l.b16 %v301
    %v612 = vunpack.c.h.b16 %v301
    %v613 = vunpack.c.l.b16 %v302
    %v614 = vunpack.c.l.b16 %v303
    %v615 = vunpack.c.h.b16 %v303
    %v616 = vunpack.c.l.b16 %v304
    %v617 = vunpack.c.l.b16 %v305
    %v618 = vunpack.c.h.b16 %v305
    %v619 = vunpack.c.l.b16 %v306
    %v620 = vunpack.c.l.b16 %v307
    %v621 = vunpack.c.h.b16 %v307
    %v622 = vunpack.c.l.b16 %v308
    %v623 = vunpack.c.l.b16 %v309
    %v624 = vunpack.c.h.b16 %v309
    %v625 = vunpack.c.l.b16 %v310
    %v626 = vunpack.c.l.b16 %v311
    %v627 = vunpack.c.h.b16 %v311
    %v628 = vunpack.c.l.b16 %v312
    %v629 = vunpack.c.l.b16 %v313
    %v630 = vunpack.c.h.b16 %v313
    %v631 = vunpack.c.l.b16 %v314
    %v632 = vunpack.c.l.b16 %v315
    %v633 = vunpack.c.h.b16 %v315
    %v634 = vunpack.c.l.b16 %v316
    %v635 = vunpack.c.l.b16 %v317
    %v636 = vunpack.c.h.b16 %v317
    %v637 = vunpack.c.l.b16 %v318
    %v638 = vunpack.c.l.b16 %v319
    %v639 = vunpack.c.h.b16 %v319
    %v640 = vunpack.c.l.b16 %v320
    %v641 = vunpack.c.l.b16 %v321
    %v642 = vunpack.c.h.b16 %v321
    %v643 = vunpack.c.l.b16 %v322
    %v644 = vunpack.c.l.b16 %v323
    %v645 = vunpack.c.h.b16 %v323
    %v646 = vunpack.c.l.b16 %v324
    %v647 = vunpack.c.l.b16 %v325
    %v648 = vunpack.c.h.b16 %v325
    %v649 = vunpack.c.l.b16 %v326
    %v650 = vunpack.c.l.b16 %v327
    %v651 = vunpack.c.h.b16 %v327
    %v652 = vunpack.c.l.b16 %v328
    %v653 = vunpack.c.l.b16 %v329
    %v654 = vunpack.c.h.b16 %v329
    %v655 = vunpack.c.l.b16 %v330
    %v656 = vunpack.c.l.b16 %v331
    %v657 = vunpack.c.h.b16 %v331
    %v658 = vunpack.c.l.b16 %v332
    %v659 = vunpack.c.l.b16 %v333
    %v660 = vunpack.c.h.b16 %v333
    %v661 = vunpack.c.l.b16 %v334
    %v662 = vunpack.c.l.b16 %v335
    %v663 = vunpack.c.h.b16 %v335
    %v664 = vunpack.c.l.b16 %v336
    %v665 = vunpack.c.l.b16 %v337
    %v666 = vunpack.c.h.b16 %v337
    %v667 = vunpack.c.l.b16 %v338
    %v668 = vunpack.c.l.b16 %v339
    %v669 = vunpack.c.h.b16 %v339
    %v670 = vunpack.c.l.b16 %v340
    %v671 = vunpack.c.l.b16 %v341
    %v672 = vunpack.c.h.b16 %v341
    %v673 = vunpack.c.l.b16 %v342
    %v674 = vunpack.c.l.b16 %v343
    %v675 = vunpack.c.h.b16 %v343
    %v676 = vunpack.c.l.b16 %v344
    %v677 = vunpack.c.l.b16 %v345
    %v678 = vunpack.c.h.b16 %v345
    %v679 = vunpack.c.l.b16 %v346
    %v680 = vunpack.c.l.b16 %v347
    %v681 = vunpack.c.h.b16 %v347
    %v682 = vunpack.c.l.b16 %v348
    %v683 = vunpack.c.l.b16 %v349
    %v684 = vunpack.c.h.b16 %v349
    %v685 = vunpack.c.l.b16 %v350
    %v686 = vunpack.c.l.b16 %v351
    %v687 = vunpack.c.h.b16 %v351
    %v688 = vunpack.c.l.b16 %v352
    %v689 = vunpack.c.l.b16 %v353
    %v690 = vunpack.c.h.b16 %v353
    %v691 = vunpack.c.l.b16 %v354
    %v692 = vpack.c.b16 %v503, %v500
    %v693 = vpack.c.b16 %v504, %v501
    %v694 = vpack.c.b16 %v505, %v502
    %v695 = vpack.c.b16 %v509, %v506
    %v696 = vpack.c.b16 %v510, %v507
    %v697 = vpack.c.b16 %v511, %v508
    %v698 = vpack.c.b16 %v515, %v512
    %v699 = vpack.c.b16 %v516, %v513
    %v700 = vpack.c.b16 %v517, %v514
    %v701 = vpack.c.b16 %v521, %v518
    %v702 = vpack.c.b16 %v522, %v519
    %v703 = vpack.c.b16 %v523, %v520
    %v704 = vpack.c.b16 %v527, %v524
    %v705 = vpack.c.b16 %v528, %v525
    %v706 = vpack.c.b16 %v529, %v526
    %v707 = vpack.c.b16 %v533, %v530
    %v708 = vpack.c.b16 %v534, %v531
    %v709 = vpack.c.b16 %v535, %v532
    %v710 = vpack.c.b16 %v539, %v536
    %v711 = vpack.c.b16 %v540, %v537
    %v712 = vpack.c.b16 %v541, %v538
    %v713 = vpack.c.b16 %v545, %v542
    %v714 = vpack.c.b16 %v546, %v543
    %v715 = vpack.c.b16 %v547, %v544
    %v716 = vpack.c.b16 %v551, %v548
    %v717 = vpack.c.b16 %v552, %v549
    %v718 = vpack.c.b16 %v553, %v550
    %v719 = vpack.c.b16 %v557, %v554
    %v720 = vpack.c.b16 %v558, %v555
    %v721 = vpack.c.b16 %v559, %v556
    %v722 = vpack.c.b16 %v563, %v560
    %v723 = vpack.c.b16 %v564, %v561
    %v724 = vpack.c.b16 %v565, %v562
    %v725 = vpack.c.b16 %v569, %v566
    %v726 = vpack.c.b16 %v570, %v567
    %v727 = vpack.c.b16 %v571, %v568
    %v728 = vpack.c.b16 %v575, %v572
    %v729 = vpack.c.b16 %v576, %v573
    %v730 = vpack.c.b16 %v577, %v574
    %v731 = vpack.c.b16 %v581, %v578
    %v732 = vpack.c.b16 %v582, %v579
    %v733 = vpack.c.b16 %v583, %v580
    %v734 = vpack.c.b16 %v587, %v584
    %v735 = vpack.c.b16 %v588, %v585
    %v736 = vpack.c.b16 %v589, %v586
    %v737 = vpack.c.b16 %v593, %v590
    %v738 = vpack.c.b16 %v594, %v591
    %v739 = vpack.c.b16 %v595, %v592
    %v740 = vpack.c.b16 %v599, %v596
    %v741 = vpack.c.b16 %v600, %v597
    %v742 = vpack.c.b16 %v601, %v598
    %v743 = vpack.c.b16 %v605, %v602
    %v744 = vpack.c.b16 %v606, %v603
    %v745 = vpack.c.b16 %v607, %v604
    %v746 = vpack.c.b16 %v611, %v608
    %v747 = vpack.c.b16 %v612, %v609
    %v748 = vpack.c.b16 %v613, %v610
    %v749 = vpack.c.b16 %v617, %v614
    %v750 = vpack.c.b16 %v618, %v615
    %v751 = vpack.c.b16 %v619, %v616
    %v752 = vpack.c.b16 %v623, %v620
    %v753 = vpack.c.b16 %v624, %v621
    %v754 = vpack.c.b16 %v625, %v622
    %v755 = vpack.c.b16 %v629, %v626
    %v756 = vpack.c.b16 %v630, %v627
    %v757 = vpack.c.b16 %v631, %v628
    %v758 = vpack.c.b16 %v635, %v632
    %v759 = vpack.c.b16 %v636, %v633
    %v760 = vpack.c.b16 %v637, %v634
    %v761 = vpack.c.b16 %v641, %v638
    %v762 = vpack.c.b16 %v642, %v639
    %v763 = vpack.c.b16 %v643, %v640
    %v764 = vpack.c.b16 %v647, %v644
    %v765 = vpack.c.b16 %v648, %v645
    %v766 = vpack.c.b16 %v649, %v646
    %v767 = vpack.c.b16 %v653, %v650
    %v768 = vpack.c.b16 %v654, %v651
    %v769 = vpack.c.b16 %v655, %v652
    %v770 = vpack.c.b16 %v659, %v656
    %v771 = vpack.c.b16 %v660, %v657
    %v772 = vpack.c.b16 %v661, %v658
    %v773 = vpack.c.b16 %v665, %v662
    %v774 = vpack.c.b16 %v666, %v663
    %v775 = vpack.c.b16 %v667, %v664
    %v776 = vpack.c.b16 %v671, %v668
    %v777 = vpack.c.b16 %v672, %v669
    %v778 = vpack.c.b16 %v673, %v670
    %v779 = vpack.c.b16 %v677, %v674
    %v780 = vpack.c.b16 %v678, %v675
    %v781 = vpack.c.b16 %v679, %v676
    %v782 = vpack.c.b16 %v683, %v680
    %v783 = vpack.c.b16 %v684, %v681
    %v784 = vpack.c.b16 %v685, %v682
    %v785 = vpack.c.b16 %v689, %v686
    %v786 = vpack.c.b16 %v690, %v687
    %v787 = vpack.c.b16 %v691, %v688
    %884 = vmatprep.subr.bf16.mxu0 %v693
    %885 = vmatpush1.bf16.msra.mxu0 %v692
    %886 = vmatprep.subr.bf16.mxu0 %v696
    %887 = vmatpush1.bf16.msra.mxu0 %v695
    %888 = vmatprep.subr.bf16.mxu0 %v699
    %889 = vmatpush1.bf16.msra.mxu0 %v698
    %890 = vmatprep.subr.bf16.mxu0 %v702
    %891 = vmatpush1.bf16.msra.mxu0 %v701
    %892 = vmatprep.subr.bf16.mxu0 %v705
    %893 = vmatpush1.bf16.msra.mxu0 %v704
    %894 = vmatprep.subr.bf16.mxu0 %v708
    %895 = vmatpush1.bf16.msra.mxu0 %v707
    %896 = vmatprep.subr.bf16.mxu0 %v711
    %897 = vmatpush1.bf16.msra.mxu0 %v710
    %898 = vmatprep.subr.bf16.mxu0 %v714
    %899 = vmatpush1.bf16.msra.mxu0 %v713
    %900 = vmatprep.subr.bf16.mxu0 %v717
    %901 = vmatpush1.bf16.msra.mxu0 %v716
    %902 = vmatprep.subr.bf16.mxu0 %v720
    %903 = vmatpush1.bf16.msra.mxu0 %v719
    %904 = vmatprep.subr.bf16.mxu0 %v723
    %905 = vmatpush1.bf16.msra.mxu0 %v722
    %906 = vmatprep.subr.bf16.mxu0 %v726
    %907 = vmatpush1.bf16.msra.mxu0 %v725
    %908 = vmatprep.subr.bf16.mxu0 %v729
    %909 = vmatpush1.bf16.msra.mxu0 %v728
    %910 = vmatprep.subr.bf16.mxu0 %v732
    %911 = vmatpush1.bf16.msra.mxu0 %v731
    %912 = vmatprep.subr.bf16.mxu0 %v735
    %913 = vmatpush1.bf16.msra.mxu0 %v734
    %914 = vmatprep.subr.bf16.mxu0 %v738
    %915 = vmatpush1.bf16.msra.mxu0 %v737
    %916 = vmatprep.mubr.bf16.mxu0 %v224
    %917 = vmatmul.mubr.bf16.gmra.mrb[0].mxu0 %v223
    %v918 = vpop.f32.mrb[0].mxu0
    %v919 = vadd.f32 %v360, %v918
    %v920 = vpop.f32.mrb[0].mxu0
    %v921 = vadd.f32 %v364, %v920
    %v922 = vpop.f32.mrb[0].mxu0
    %v923 = vpop.f32.mrb[0].mxu0
    %924 = vdwg.mxu0
    %925 = vmatprep.subr.bf16.mxu0 %v741
    %926 = vmatpush1.bf16.msra.mxu0 %v740
    %927 = vmatprep.subr.bf16.mxu0 %v744
    %928 = vmatpush1.bf16.msra.mxu0 %v743
    %929 = vmatprep.subr.bf16.mxu0 %v747
    %930 = vmatpush1.bf16.msra.mxu0 %v746
    %931 = vmatprep.subr.bf16.mxu0 %v750
    %932 = vmatpush1.bf16.msra.mxu0 %v749
    %933 = vmatprep.subr.bf16.mxu0 %v753
    %934 = vmatpush1.bf16.msra.mxu0 %v752
    %935 = vmatprep.subr.bf16.mxu0 %v756
    %936 = vmatpush1.bf16.msra.mxu0 %v755
    %937 = vmatprep.subr.bf16.mxu0 %v759
    %938 = vmatpush1.bf16.msra.mxu0 %v758
    %939 = vmatprep.subr.bf16.mxu0 %v762
    %940 = vmatpush1.bf16.msra.mxu0 %v761
    %941 = vmatprep.subr.bf16.mxu0 %v765
    %942 = vmatpush1.bf16.msra.mxu0 %v764
    %943 = vmatprep.subr.bf16.mxu0 %v768
    %944 = vmatpush1.bf16.msra.mxu0 %v767
    %945 = vmatprep.subr.bf16.mxu0 %v771
    %946 = vmatpush1.bf16.msra.mxu0 %v770
    %947 = vmatprep.subr.bf16.mxu0 %v774
    %948 = vmatpush1.bf16.msra.mxu0 %v773
    %949 = vmatprep.subr.bf16.mxu0 %v777
    %950 = vmatpush1.bf16.msra.mxu0 %v776
    %951 = vmatprep.subr.bf16.mxu0 %v780
    %952 = vmatpush1.bf16.msra.mxu0 %v779
    %953 = vmatprep.subr.bf16.mxu0 %v783
    %954 = vmatpush1.bf16.msra.mxu0 %v782
    %955 = vmatprep.subr.bf16.mxu0 %v786
    %956 = vmatpush1.bf16.msra.mxu0 %v785
    %957 = vmatprep.mubr.bf16.mxu0 %v226
    %958 = vmatmul.mubr.bf16.gmra.mrb[0].mxu0 %v225
    %v959 = vpop.f32.mrb[0].mxu0
    %v960 = vadd.f32 %v919, %v959
    %v961 = vpop.f32.mrb[0].mxu0
    %v962 = vadd.f32 %v921, %v961
    %v963 = vpop.f32.mrb[0].mxu0
    %v964 = vpop.f32.mrb[0].mxu0
    %965 = vdwg.mxu0
    %966 = vmatprep.subr.bf16.mxu0 0
    %967 = vmatpush1.bf16.msra.mxu0 %v694
    %968 = vmatprep.subr.bf16.mxu0 0
    %969 = vmatpush1.bf16.msra.mxu0 %v697
    %970 = vmatprep.subr.bf16.mxu0 0
    %971 = vmatpush1.bf16.msra.mxu0 %v700
    %972 = vmatprep.subr.bf16.mxu0 0
    %973 = vmatpush1.bf16.msra.mxu0 %v703
    %974 = vmatprep.subr.bf16.mxu0 0
    %975 = vmatpush1.bf16.msra.mxu0 %v706
    %976 = vmatprep.subr.bf16.mxu0 0
    %977 = vmatpush1.bf16.msra.mxu0 %v709
    %978 = vmatprep.subr.bf16.mxu0 0
    %979 = vmatpush1.bf16.msra.mxu0 %v712
    %980 = vmatprep.subr.bf16.mxu0 0
    %981 = vmatpush1.bf16.msra.mxu0 %v715
    %982 = vmatprep.subr.bf16.mxu0 0
    %983 = vmatpush1.bf16.msra.mxu0 %v718
    %984 = vmatprep.subr.bf16.mxu0 0
    %985 = vmatpush1.bf16.msra.mxu0 %v721
    %986 = vmatprep.subr.bf16.mxu0 0
    %987 = vmatpush1.bf16.msra.mxu0 %v724
    %988 = vmatprep.subr.bf16.mxu0 0
    %989 = vmatpush1.bf16.msra.mxu0 %v727
    %990 = vmatprep.subr.bf16.mxu0 0
    %991 = vmatpush1.bf16.msra.mxu0 %v730
    %992 = vmatprep.subr.bf16.mxu0 0
    %993 = vmatpush1.bf16.msra.mxu0 %v733
    %994 = vmatprep.subr.bf16.mxu0 0
    %995 = vmatpush1.bf16.msra.mxu0 %v736
    %996 = vmatprep.subr.bf16.mxu0 0
    %997 = vmatpush1.bf16.msra.mxu0 %v739
    %998 = vmatprep.mubr.bf16.mxu0 %v224
    %999 = vmatmul.mubr.bf16.gmra.mrb[0].mxu0 %v223
    %v1000 = vpop.f32.mrb[0].mxu0
    %v1001 = vadd.f32 %v368, %v1000
    %v1002 = vpop.f32.mrb[0].mxu0
    %v1003 = vpop.f32.mrb[0].mxu0
    %v1004 = vpop.f32.mrb[0].mxu0
    %1005 = vdwg.mxu0
    %1006 = vmatprep.subr.bf16.mxu0 0
    %1007 = vmatpush1.bf16.msra.mxu0 %v742
    %1008 = vmatprep.subr.bf16.mxu0 0
    %1009 = vmatpush1.bf16.msra.mxu0 %v745
    %1010 = vmatprep.subr.bf16.mxu0 0
    %1011 = vmatpush1.bf16.msra.mxu0 %v748
    %1012 = vmatprep.subr.bf16.mxu0 0
    %1013 = vmatpush1.bf16.msra.mxu0 %v751
    %1014 = vmatprep.subr.bf16.mxu0 0
    %1015 = vmatpush1.bf16.msra.mxu0 %v754
    %1016 = vmatprep.subr.bf16.mxu0 0
    %1017 = vmatpush1.bf16.msra.mxu0 %v757
    %1018 = vmatprep.subr.bf16.mxu0 0
    %1019 = vmatpush1.bf16.msra.mxu0 %v760
    %1020 = vmatprep.subr.bf16.mxu0 0
    %1021 = vmatpush1.bf16.msra.mxu0 %v763
    %1022 = vmatprep.subr.bf16.mxu0 0
    %1023 = vmatpush1.bf16.msra.mxu0 %v766
    %1024 = vmatprep.subr.bf16.mxu0 0
    %1025 = vmatpush1.bf16.msra.mxu0 %v769
    %1026 = vmatprep.subr.bf16.mxu0 0
    %1027 = vmatpush1.bf16.msra.mxu0 %v772
    %1028 = vmatprep.subr.bf16.mxu0 0
    %1029 = vmatpush1.bf16.msra.mxu0 %v775
    %1030 = vmatprep.subr.bf16.mxu0 0
    %1031 = vmatpush1.bf16.msra.mxu0 %v778
    %1032 = vmatprep.subr.bf16.mxu0 0
    %1033 = vmatpush1.bf16.msra.mxu0 %v781
    %1034 = vmatprep.subr.bf16.mxu0 0
    %1035 = vmatpush1.bf16.msra.mxu0 %v784
    %1036 = vmatprep.subr.bf16.mxu0 0
    %1037 = vmatpush1.bf16.msra.mxu0 %v787
    %1038 = vmatprep.mubr.bf16.mxu0 %v226
    %1039 = vmatmul.mubr.bf16.gmra.mrb[0].mxu0 %v225
    %v1040 = vpop.f32.mrb[0].mxu0
    %v1041 = vadd.f32 %v1001, %v1040
    %v1042 = vpop.f32.mrb[0].mxu0
    %v1043 = vpop.f32.mrb[0].mxu0
    %v1044 = vpop.f32.mrb[0].mxu0
    %1045 = vdwg.mxu0
    %v1046 = vmul.f32 %v960, 0.01
    %v1047 = vmul.f32 %v962, 0.01
    %v1048 = vmul.f32 %v1041, 0.01
    %v1049 = vmax.f32 %v960, %v1046
    %v1050 = vmax.f32 %v962, %v1047
    %v1051 = vmax.f32 %v1041, %v1048
    %v1052 = vpack.c.bf16 %v1049, %v1049
    %v1053 = vpack.c.bf16 %v1050, %v1050
    %v1054 = vpack.c.bf16 %v1051, %v1051
    %v1055 = vld [vmem:[#allocation8] sm:$0xf]
    %v1056 = vld [vmem:[#allocation8 + $0x4] sm:$0xf]
    %v1057 = vld [vmem:[#allocation8 + $0x8] sm:$0xf]
    %v1058 = vld [vmem:[#allocation8 + $0xc] sm:$0xf]
    %v1059 = vld [vmem:[#allocation8 + $0x10] sm:$0xf]
    %v1060 = vld [vmem:[#allocation8 + $0x14] sm:$0xf]
    %v1061 = vld [vmem:[#allocation8 + $0x18] sm:$0xf]
    %v1062 = vld [vmem:[#allocation8 + $0x1c] sm:$0xf]
    %v1063 = vld [vmem:[#allocation8 + $0x20] sm:$0xf]
    %v1064 = vld [vmem:[#allocation8 + $0x24] sm:$0xf]
    %v1065 = vld [vmem:[#allocation8 + $0x28] sm:$0xf]
    %v1066 = vld [vmem:[#allocation8 + $0x2c] sm:$0xf]
    %v1067 = vld [vmem:[#allocation8 + $0x30] sm:$0xf]
    %v1068 = vld [vmem:[#allocation8 + $0x34] sm:$0xf]
    %v1069 = vld [vmem:[#allocation8 + $0x38] sm:$0xf]
    %v1070 = vld [vmem:[#allocation8 + $0x3c] sm:$0xf]
    %v1071 = vld [vmem:[#allocation8 + $0x40] sm:$0xf]
    %v1072 = vld [vmem:[#allocation8 + $0x44] sm:$0xf]
    %v1073 = vld [vmem:[#allocation8 + $0x48] sm:$0xf]
    %v1074 = vld [vmem:[#allocation8 + $0x4c] sm:$0xf]
    %v1075 = vld [vmem:[#allocation8 + $0x50] sm:$0xf]
    %v1076 = vld [vmem:[#allocation8 + $0x54] sm:$0xf]
    %v1077 = vld [vmem:[#allocation8 + $0x58] sm:$0xf]
    %v1078 = vld [vmem:[#allocation8 + $0x5c] sm:$0xf]
    %v1079 = vld [vmem:[#allocation8 + $0x60] sm:$0xf]
    %v1080 = vld [vmem:[#allocation8 + $0x64] sm:$0xf]
    %v1081 = vld [vmem:[#allocation8 + $0x68] sm:$0xf]
    %v1082 = vld [vmem:[#allocation8 + $0x6c] sm:$0xf]
    %v1083 = vld [vmem:[#allocation8 + $0x70] sm:$0xf]
    %v1084 = vld [vmem:[#allocation8 + $0x74] sm:$0xf]
    %v1085 = vld [vmem:[#allocation8 + $0x78] sm:$0xf]
    %v1086 = vld [vmem:[#allocation8 + $0x7c] sm:$0xf]
    %v1087 = vld [vmem:[#allocation8 + $0x80] sm:$0xf]
    %v1088 = vld [vmem:[#allocation8 + $0x84] sm:$0xf]
    %v1089 = vld [vmem:[#allocation8 + $0x88] sm:$0xf]
    %v1090 = vld [vmem:[#allocation8 + $0x8c] sm:$0xf]
    %v1091 = vld [vmem:[#allocation8 + $0x90] sm:$0xf]
    %v1092 = vld [vmem:[#allocation8 + $0x94] sm:$0xf]
    %v1093 = vld [vmem:[#allocation8 + $0x98] sm:$0xf]
    %v1094 = vld [vmem:[#allocation8 + $0x9c] sm:$0xf]
    %v1095 = vld [vmem:[#allocation8 + $0xa0] sm:$0xf]
    %v1096 = vld [vmem:[#allocation8 + $0xa4] sm:$0xf]
    %v1097 = vld [vmem:[#allocation8 + $0xa8] sm:$0xf]
    %v1098 = vld [vmem:[#allocation8 + $0xac] sm:$0xf]
    %v1099 = vld [vmem:[#allocation8 + $0xb0] sm:$0xf]
    %v1100 = vld [vmem:[#allocation8 + $0xb4] sm:$0xf]
    %v1101 = vld [vmem:[#allocation8 + $0xb8] sm:$0xf]
    %v1102 = vld [vmem:[#allocation8 + $0xbc] sm:$0xf]
    %v1103 = vld [vmem:[%s6] sm:$0x1]
    %v1105 = vlaneseq
    %v1106 = vshrl.u32 %v1105, 7
    %v1107 = vsub.s32 0, %v1106
    %v1108 = vrot.slane %v1103, %v1107
    %v1158 = vunpack.c.l.b16 %v1055
    %v1159 = vunpack.c.l.b16 %v1056
    %v1160 = vunpack.c.l.b16 %v1057
    %v1161 = vunpack.c.l.b16 %v1058
    %v1162 = vunpack.c.l.b16 %v1059
    %v1163 = vunpack.c.l.b16 %v1060
    %v1164 = vunpack.c.l.b16 %v1061
    %v1165 = vunpack.c.l.b16 %v1062
    %v1166 = vunpack.c.l.b16 %v1063
    %v1167 = vunpack.c.l.b16 %v1064
    %v1168 = vunpack.c.l.b16 %v1065
    %v1169 = vunpack.c.l.b16 %v1066
    %v1170 = vunpack.c.l.b16 %v1067
    %v1171 = vunpack.c.l.b16 %v1068
    %v1172 = vunpack.c.l.b16 %v1069
    %v1173 = vunpack.c.l.b16 %v1070
    %v1174 = vunpack.c.l.b16 %v1071
    %v1175 = vunpack.c.l.b16 %v1072
    %v1176 = vunpack.c.l.b16 %v1073
    %v1177 = vunpack.c.l.b16 %v1074
    %v1178 = vunpack.c.l.b16 %v1075
    %v1179 = vunpack.c.l.b16 %v1076
    %v1180 = vunpack.c.l.b16 %v1077
    %v1181 = vunpack.c.l.b16 %v1078
    %v1182 = vunpack.c.l.b16 %v1079
    %v1183 = vunpack.c.l.b16 %v1080
    %v1184 = vunpack.c.l.b16 %v1081
    %v1185 = vunpack.c.l.b16 %v1082
    %v1186 = vunpack.c.l.b16 %v1083
    %v1187 = vunpack.c.l.b16 %v1084
    %v1188 = vunpack.c.l.b16 %v1085
    %v1189 = vunpack.c.l.b16 %v1086
    %v1190 = vunpack.c.l.b16 %v1087
    %v1191 = vunpack.c.l.b16 %v1088
    %v1192 = vunpack.c.l.b16 %v1089
    %v1193 = vunpack.c.l.b16 %v1090
    %v1194 = vunpack.c.l.b16 %v1091
    %v1195 = vunpack.c.l.b16 %v1092
    %v1196 = vunpack.c.l.b16 %v1093
    %v1197 = vunpack.c.l.b16 %v1094
    %v1198 = vunpack.c.l.b16 %v1095
    %v1199 = vunpack.c.l.b16 %v1096
    %v1200 = vunpack.c.l.b16 %v1097
    %v1201 = vunpack.c.l.b16 %v1098
    %v1202 = vunpack.c.l.b16 %v1099
    %v1203 = vunpack.c.l.b16 %v1100
    %v1204 = vunpack.c.l.b16 %v1101
    %v1205 = vunpack.c.l.b16 %v1102
    %v1206 = vpack.c.b16 %v1159, %v1158
    %v1207 = vpack.c.b16 %v1161, %v1160
    %v1208 = vpack.c.b16 %v1163, %v1162
    %v1209 = vpack.c.b16 %v1165, %v1164
    %v1210 = vpack.c.b16 %v1167, %v1166
    %v1211 = vpack.c.b16 %v1169, %v1168
    %v1212 = vpack.c.b16 %v1171, %v1170
    %v1213 = vpack.c.b16 %v1173, %v1172
    %v1214 = vpack.c.b16 %v1175, %v1174
    %v1215 = vpack.c.b16 %v1177, %v1176
    %v1216 = vpack.c.b16 %v1179, %v1178
    %v1217 = vpack.c.b16 %v1181, %v1180
    %v1218 = vpack.c.b16 %v1183, %v1182
    %v1219 = vpack.c.b16 %v1185, %v1184
    %v1220 = vpack.c.b16 %v1187, %v1186
    %v1221 = vpack.c.b16 %v1189, %v1188
    %v1222 = vpack.c.b16 %v1191, %v1190
    %v1223 = vpack.c.b16 %v1193, %v1192
    %v1224 = vpack.c.b16 %v1195, %v1194
    %v1225 = vpack.c.b16 %v1197, %v1196
    %v1226 = vpack.c.b16 %v1199, %v1198
    %v1227 = vpack.c.b16 %v1201, %v1200
    %v1228 = vpack.c.b16 %v1203, %v1202
    %v1229 = vpack.c.b16 %v1205, %v1204
    %1254 = vmatprep.subr.bf16.mxu0 0
    %1255 = vmatpush1.bf16.msra.mxu0 %v1206
    %1256 = vmatprep.subr.bf16.mxu0 0
    %1257 = vmatpush1.bf16.msra.mxu0 %v1207
    %1258 = vmatprep.subr.bf16.mxu0 0
    %1259 = vmatpush1.bf16.msra.mxu0 %v1208
    %1260 = vmatprep.subr.bf16.mxu0 0
    %1261 = vmatpush1.bf16.msra.mxu0 %v1209
    %1262 = vmatprep.subr.bf16.mxu0 0
    %1263 = vmatpush1.bf16.msra.mxu0 %v1210
    %1264 = vmatprep.subr.bf16.mxu0 0
    %1265 = vmatpush1.bf16.msra.mxu0 %v1211
    %1266 = vmatprep.subr.bf16.mxu0 0
    %1267 = vmatpush1.bf16.msra.mxu0 %v1212
    %1268 = vmatprep.subr.bf16.mxu0 0
    %1269 = vmatpush1.bf16.msra.mxu0 %v1213
    %1270 = vmatprep.subr.bf16.mxu0 0
    %1271 = vmatpush1.bf16.msra.mxu0 %v1214
    %1272 = vmatprep.subr.bf16.mxu0 0
    %1273 = vmatpush1.bf16.msra.mxu0 %v1215
    %1274 = vmatprep.subr.bf16.mxu0 0
    %1275 = vmatpush1.bf16.msra.mxu0 %v1216
    %1276 = vmatprep.subr.bf16.mxu0 0
    %1277 = vmatpush1.bf16.msra.mxu0 %v1217
    %1278 = vmatprep.subr.bf16.mxu0 0
    %1279 = vmatpush1.bf16.msra.mxu0 %v1218
    %1280 = vmatprep.subr.bf16.mxu0 0
    %1281 = vmatpush1.bf16.msra.mxu0 %v1219
    %1282 = vmatprep.subr.bf16.mxu0 0
    %1283 = vmatpush1.bf16.msra.mxu0 %v1220
    %1284 = vmatprep.subr.bf16.mxu0 0
    %1285 = vmatpush1.bf16.msra.mxu0 %v1221
    %1286 = vmatprep.mubr.bf16.mxu0 %v1053
    %1287 = vmatmul.mubr.bf16.gmra.mrb[0].mxu0 %v1052
    %v1288 = vpop.f32.mrb[0].mxu0
    %v1289 = vadd.f32 %v1108, %v1288
    %v1290 = vpop.f32.mrb[0].mxu0
    %v1291 = vpop.f32.mrb[0].mxu0
    %v1292 = vpop.f32.mrb[0].mxu0
    %1293 = vdwg.mxu0
    %1294 = vmatprep.subr.bf16.mxu0 0
    %1295 = vmatpush1.bf16.msra.mxu0 %v1222
    %1296 = vmatprep.subr.bf16.mxu0 0
    %1297 = vmatpush1.bf16.msra.mxu0 %v1223
    %1298 = vmatprep.subr.bf16.mxu0 0
    %1299 = vmatpush1.bf16.msra.mxu0 %v1224
    %1300 = vmatprep.subr.bf16.mxu0 0
    %1301 = vmatpush1.bf16.msra.mxu0 %v1225
    %1302 = vmatprep.subr.bf16.mxu0 0
    %1303 = vmatpush1.bf16.msra.mxu0 %v1226
    %1304 = vmatprep.subr.bf16.mxu0 0
    %1305 = vmatpush1.bf16.msra.mxu0 %v1227
    %1306 = vmatprep.subr.bf16.mxu0 0
    %1307 = vmatpush1.bf16.msra.mxu0 %v1228
    %1308 = vmatprep.subr.bf16.mxu0 0
    %1309 = vmatpush1.bf16.msra.mxu0 %v1229
    %1310 = vmatprep.subr.bf16.mxu0 0
    %1311 = vmatpush1.bf16.msra.mxu0 0
    %1312 = vmatprep.subr.bf16.mxu0 0
    %1313 = vmatpush1.bf16.msra.mxu0 0
    %1314 = vmatprep.subr.bf16.mxu0 0
    %1315 = vmatpush1.bf16.msra.mxu0 0
    %1316 = vmatprep.subr.bf16.mxu0 0
    %1317 = vmatpush1.bf16.msra.mxu0 0
    %1318 = vmatprep.subr.bf16.mxu0 0
    %1319 = vmatpush1.bf16.msra.mxu0 0
    %1320 = vmatprep.subr.bf16.mxu0 0
    %1321 = vmatpush1.bf16.msra.mxu0 0
    %1322 = vmatprep.subr.bf16.mxu0 0
    %1323 = vmatpush1.bf16.msra.mxu0 0
    %1324 = vmatprep.subr.bf16.mxu0 0
    %1325 = vmatpush1.bf16.msra.mxu0 0
    %1326 = vmatprep.mubr.bf16.mxu0 0
    %1327 = vmatmul.mubr.bf16.gmra.mrb[0].mxu0 %v1054
    %v1328 = vpop.f32.mrb[0].mxu0
    %v1329 = vadd.f32 %v1289, %v1328
    %v1330 = vpop.f32.mrb[0].mxu0
    %v1331 = vpop.f32.mrb[0].mxu0
    %v1332 = vpop.f32.mrb[0].mxu0
    %1333 = vdwg.mxu0
    %v1334 = vtanh.pop %v1329
    %v1335 = vmul.f32 %v1334, 2.0
    %1336 = vst [vmem:[#allocation10] sm:$0xff] %v1335
    // Predicated region
    $region46: #{tpu_custom_call.1} parent=1 // pred_check
      _
    $region47: #{tpu_custom_call.1} parent=1 // pred_check_branch
      %1338 = sbr.rel (0) target = $region49
    $region48: #{tpu_custom_call.1} parent=1 // pred_region
      %s1340 = ssub.s32 128, 128
      %1341 = vsyncadd [#allocation4], %s1340
      %s1343 = sshll.u32 [#allocation10], 4
      %s1344 = int_to_ptr.vmem [resolvable:$true] %s1343
      %1346 = dma.vmem_to_hbm [thread:$0]  %s1344, 128, %s7, [#allocation4]
    $region49: #{tpu_custom_call.1} parent=1 // pred_fallthru
      _
    // Predicated region
    $region50: #{tpu_custom_call.1} parent=1 // pred_check
      _
    $region51: #{tpu_custom_call.1} parent=1 // pred_check_branch
      %1348 = sbr.rel (0) target = $region53
    $region52: #{tpu_custom_call.1} parent=1 // pred_region
      %1349 = dma.done [#allocation4], 128
    $region53: #{tpu_custom_call.1} parent=1 // pred_fallthru
      _
    %1350 = vsyncpa [#allocation3], 1
    %1351 = vsyncpa [#allocation6], 1
    %1352 = vsyncpa [#allocation9], 1
    %1353 = vsyncpa [#allocation4], 1

</llo_original>
